<compile_context>
chip_gen: v5e
topology: v5e:2x2
jax: 0.10.0
libtpu: 0.0.40
codegen_flags: <defaults>
</compile_context>

<pallas_src>
import math

import jax
import jax.numpy as jnp
from jax.experimental import pallas as pl
from jax.experimental.pallas import tpu as pltpu


def _round_up(x, m):
    return ((x + m - 1) // m) * m


def _biaffine_kernel(x1_ref, x2t_ref, w_ref, o_ref):
    # x1_ref : (1, tn1, d1_pad)    block of [input1|1], zero padded
    # x2t_ref: (1, d2_pad, n2_pad) [input2|1] pre-transposed (features on sublanes)
    # w_ref  : (1, d1_pad, d2_pad) one output channel's weight slab (bias folded in)
    # o_ref  : (1, 1, tn1, n2_pad) lane-dense output block (lanes = n2)
    xw = jnp.dot(x1_ref[0], w_ref[0], preferred_element_type=jnp.float32)   # MXU
    y = jnp.dot(xw, x2t_ref[0], preferred_element_type=jnp.float32)         # MXU
    o_ref[0, 0] = y.astype(o_ref.dtype)


def biaffine_pallas(input1, input2, weight, bias):
    """input1: (B, n1, d1), input2: (B, n2, d2),
       weight: (d1+1, out, d2+1), bias: (out,) -> (B, n1, n2, out)."""
    B, n1, d1 = input1.shape
    B2, n2, d2 = input2.shape
    d1p, out_f, d2p = weight.shape
    assert B == B2 and d1p == d1 + 1 and d2p == d2 + 1

    f32 = jnp.float32

    # --- alignment / padding (zero padding on contracted dims is exact) -----
    d1_pad = _round_up(d1p, 128)      # lane dim of x1 / contraction dim 1
    d2_pad = _round_up(d2p, 128)      # lane dim of xw / contraction dim 2
    n2_pad = _round_up(n2, 8)         # lane dim of the output
    n1_pad8 = _round_up(n1, 8)
    if n1_pad8 <= 256:
        tn1, n1_pad = n1_pad8, n1_pad8
    else:
        tn1, n1_pad = 256, _round_up(n1, 256)

    # [input1 | 1], zero-padded to (B, n1_pad, d1_pad)
    x1p = jnp.zeros((B, n1_pad, d1_pad), f32)
    x1p = x1p.at[:, :n1, :d1].set(input1.astype(f32))
    x1p = x1p.at[:, :n1, d1].set(1.0)

    # [input2 | 1], zero-padded, then pre-transposed to (B, d2_pad, n2_pad)
    # so the kernel runs plain 2-D matmuls (no in-kernel transpose).
    x2p = jnp.zeros((B, n2_pad, d2_pad), f32)
    x2p = x2p.at[:, :n2, :d2].set(input2.astype(f32))
    x2p = x2p.at[:, :n2, d2].set(1.0)
    x2t = jnp.transpose(x2p, (0, 2, 1))

    # Weight: fold bias into the (bias-feature, bias-feature) entry (the
    # appended 1s pick it up as "+ bias[o]"), put `out` on the leading axis so
    # grid slicing is a free view, and zero-pad the contracted dims.
    w_folded = weight.astype(f32).at[d1, :, d2].add(bias.astype(f32))
    w_t = jnp.transpose(w_folded, (1, 0, 2))                  # (out, d1p, d2p)
    w_pad = jnp.zeros((out_f, d1_pad, d2_pad), f32)
    w_pad = w_pad.at[:, :d1p, :d2p].set(w_t)

    grid = (B, out_f, n1_pad // tn1)

    y = pl.pallas_call(
        _biaffine_kernel,
        out_shape=jax.ShapeDtypeStruct((B, out_f, n1_pad, n2_pad), f32),
        grid_spec=pltpu.PrefetchScalarGridSpec(
            num_scalar_prefetch=0,
            grid=grid,
            in_specs=[
                pl.BlockSpec((1, tn1, d1_pad), lambda b, o, i: (b, i, 0)),
                pl.BlockSpec((1, d2_pad, n2_pad), lambda b, o, i: (b, 0, 0)),
                pl.BlockSpec((1, d1_pad, d2_pad), lambda b, o, i: (o, 0, 0)),
            ],
            out_specs=pl.BlockSpec((1, 1, tn1, n2_pad),
                                   lambda b, o, i: (b, o, i, 0)),
        ),
        compiler_params=pltpu.CompilerParams(
            dimension_semantics=("parallel", "parallel", "parallel"),
        ),
    )(x1p, x2t, w_pad)

    # Kernel writes lane-dense (B, out, n1, n2); transpose once in XLA to the
    # module's (B, n1, n2, out) layout.
    y = y[:, :, :n1, :n2]
    return jnp.transpose(y, (0, 2, 3, 1))


def biaffine_reference(input1, input2, weight, bias):
    ones1 = jnp.ones(input1.shape[:-1] + (1,), dtype=input1.dtype)
    ones2 = jnp.ones(input2.shape[:-1] + (1,), dtype=input2.dtype)
    x1 = jnp.concatenate([input1, ones1], axis=-1)
    x2 = jnp.concatenate([input2, ones2], axis=-1)
    y = jnp.einsum("bip,poq,bjq->bijo", x1, weight, x2)
    return y + bias


if __name__ == "__main__":
    # Small shapes consistent with the module.
    B, n1, n2 = 2, 8, 8
    in1_features, in2_features, out_features = 32, 32, 4
    d1p, d2p = in1_features + 1, in2_features + 1

    key = jax.random.PRNGKey(0)
    k1, k2, kw, kb = jax.random.split(key, 4)
    input1 = jax.random.normal(k1, (B, n1, in1_features), dtype=jnp.float32)
    input2 = jax.random.normal(k2, (B, n2, in2_features), dtype=jnp.float32)

    # PairwiseBilinear.reset_parameters: uniform(-1/sqrt(d1p), 1/sqrt(d1p))
    bound = 1.0 / math.sqrt(d1p)
    weight = jax.random.uniform(kw, (d1p, out_features, d2p),
                                minval=-bound, maxval=bound, dtype=jnp.float32)
    bias = jax.random.uniform(kb, (out_features,),
                              minval=-bound, maxval=bound, dtype=jnp.float32)

    y = biaffine_pallas(input1, input2, weight, bias)
    y = jax.block_until_ready(y)

    y_ref = biaffine_reference(input1, input2, weight, bias)
    assert y.shape == (B, n1, n2, out_features)
    assert jnp.allclose(y, y_ref, atol=1e-4, rtol=1e-4)

    print("KERNEL_OK")
</pallas_src>

<mosaic_0001>
module attributes {stable_mosaic.version = 11 : i64} {
  func.func @_biaffine_kernel(%arg0: i32, %arg1: i32, %arg2: i32, %arg3: memref<1x8x128xf32, #tpu.memory_space<vmem>>, %arg4: memref<1x128x8xf32, #tpu.memory_space<vmem>>, %arg5: memref<1x128x128xf32, #tpu.memory_space<vmem>>, %arg6: memref<1x1x8x8xf32, #tpu.memory_space<vmem>>) attributes {dimension_semantics = [#tpu.dimension_semantics<parallel>, #tpu.dimension_semantics<parallel>, #tpu.dimension_semantics<parallel>], iteration_bounds = array<i64: 2, 4, 1>, scalar_prefetch = 0 : i64, scratch_operands = 0 : i64, tpu.core_type = #tpu.core_type<tc>, window_params = [{transform_indices = @transform_0, window_bounds = array<i64: 1, 8, 128>}, {transform_indices = @transform_1, window_bounds = array<i64: 1, 128, 8>}, {transform_indices = @transform_2, window_bounds = array<i64: 1, 128, 128>}, {transform_indices = @transform_3, window_bounds = array<i64: 1, 1, 8, 8>}]} {
    %c0 = arith.constant 0 : index
    %c0_0 = arith.constant 0 : index
    %c0_1 = arith.constant 0 : index
    %0 = vector.load %arg3[%c0, %c0_0, %c0_1] : memref<1x8x128xf32, #tpu.memory_space<vmem>>, vector<1x8x128xf32>
    %1 = vector.shape_cast %0 : vector<1x8x128xf32> to vector<8x128xf32>
    %c0_2 = arith.constant 0 : index
    %c0_3 = arith.constant 0 : index
    %c0_4 = arith.constant 0 : index
    %2 = vector.load %arg5[%c0_2, %c0_3, %c0_4] : memref<1x128x128xf32, #tpu.memory_space<vmem>>, vector<1x128x128xf32>
    %3 = vector.shape_cast %2 : vector<1x128x128xf32> to vector<128x128xf32>
    %cst = arith.constant dense<0.000000e+00> : vector<8x128xf32>
    %4 = tpu.matmul %1, %3, %cst {dimension_numbers = #tpu.dot_dimension_numbers<[1], [0], [0], [1], [0, 0, 1, 1], [], []>} : vector<8x128xf32>, vector<128x128xf32>, vector<8x128xf32> -> vector<8x128xf32>
    %c0_5 = arith.constant 0 : index
    %c0_6 = arith.constant 0 : index
    %c0_7 = arith.constant 0 : index
    %5 = vector.load %arg4[%c0_5, %c0_6, %c0_7] : memref<1x128x8xf32, #tpu.memory_space<vmem>>, vector<1x128x8xf32>
    %6 = vector.shape_cast %5 : vector<1x128x8xf32> to vector<128x8xf32>
    %cst_8 = arith.constant dense<0.000000e+00> : vector<8x8xf32>
    %7 = tpu.matmul %4, %6, %cst_8 {dimension_numbers = #tpu.dot_dimension_numbers<[1], [0], [0], [1], [0, 0, 1, 1], [], []>} : vector<8x128xf32>, vector<128x8xf32>, vector<8x8xf32> -> vector<8x8xf32>
    %c0_9 = arith.constant 0 : index
    %c0_10 = arith.constant 0 : index
    %c0_11 = arith.constant 0 : index
    %c0_12 = arith.constant 0 : index
    %8 = vector.load %arg6[%c0_9, %c0_10, %c0_11, %c0_12] : memref<1x1x8x8xf32, #tpu.memory_space<vmem>>, vector<1x1x8x8xf32>
    %9 = vector.shape_cast %8 : vector<1x1x8x8xf32> to vector<8x8xf32>
    %10 = vector.shape_cast %7 : vector<8x8xf32> to vector<1x1x8x8xf32>
    tpu.vector_store %arg6[%c0_9, %c0_10, %c0_11, %c0_12], %10 {strides = array<i32>} : memref<1x1x8x8xf32, #tpu.memory_space<vmem>>, vector<1x1x8x8xf32>,
    return
  }
  func.func @transform_0(%arg0: i32, %arg1: i32, %arg2: i32) -> (i32, i32, i32) {
    %c0_i32 = arith.constant 0 : i32
    %c0_i32_0 = arith.constant 0 : i32
    return %arg0, %arg2, %c0_i32 : i32, i32, i32
  }
  func.func @transform_1(%arg0: i32, %arg1: i32, %arg2: i32) -> (i32, i32, i32) {
    %c0_i32 = arith.constant 0 : i32
    %c0_i32_0 = arith.constant 0 : i32
    %c0_i32_1 = arith.constant 0 : i32
    return %arg0, %c0_i32, %c0_i32_0 : i32, i32, i32
  }
  func.func @transform_2(%arg0: i32, %arg1: i32, %arg2: i32) -> (i32, i32, i32) {
    %c0_i32 = arith.constant 0 : i32
    %c0_i32_0 = arith.constant 0 : i32
    %c0_i32_1 = arith.constant 0 : i32
    return %arg1, %c0_i32, %c0_i32_0 : i32, i32, i32
  }
  func.func @transform_3(%arg0: i32, %arg1: i32, %arg2: i32) -> (i32, i32, i32, i32) {
    %c0_i32 = arith.constant 0 : i32
    %c0_i32_0 = arith.constant 0 : i32
    return %arg0, %arg1, %arg2, %c0_i32 : i32, i32, i32, i32
  }
}

</mosaic_0001>

<llo_original>
// kernel: tpu_custom_call.1
$region0: #{tpu_custom_call.1}
  #allocation0 [shape = 'u32[]', space=smem, size = 0x4, offset = 0x4, fixed_abs, tag = 'smem constant byte address 0x4 - core index']
  #allocation1 [shape = 'u32[72,128]{1,0:T(1,128)}', space=vmem, size = 0x9000, scoped, tag = 'internal scratch']
  %s0 = inlined_call_operand.vmem [shape: f32[2,8,128], index: 0, kind: input, shape index: {}]
  %s1 = inlined_call_operand.vmem [shape: f32[2,128,8], index: 1, kind: input, shape index: {}]
  %s2 = inlined_call_operand.hbm [shape: f32[4,128,128], index: 2, kind: input, shape index: {}]
  %s3 = inlined_call_operand.hbm [shape: f32[2,4,8,8], index: 3, kind: output, shape index: {}]
  %s4 = sld [smem:[#allocation0]]
  $region49: #{tpu_custom_call.1} parent=0
    _
  %s6 = ssub.s32 1, %s4
  %s7 = scalar_select 0, %s6, %s4
  $region1: #{tpu_custom_call.1} parent=0
    #allocation2 [shape = 'u8[131072]{0}', space=vmem, size = 0x20000, scoped, tag = 'input window, operand 2']
    #allocation3 [shape = 's32[2]{0}', space=sflag, size = 0x8, scoped, tag = 'scoped memory for tpu_custom_call.1']
    #allocation4 [shape = 's32[2]{0}', space=sflag, size = 0x8, scoped, tag = 'scoped memory for tpu_custom_call.1']
    #allocation5 [shape = 'u8[8192]{0}', space=vmem, size = 0x2000, scoped, tag = 'output window, operand 0']
    %8 = vsyncpa [#allocation3], 0
    %s9 = scalar_lea.sflag [#allocation3], 1
    %10 = vsyncpa %s9, 0
    %11 = vsyncpa [#allocation4], 0
    %s12 = scalar_lea.sflag [#allocation4], 1
    %13 = vsyncpa %s12, 0
    loop: start=0, step=1, limit=10
    $region2: #{tpu_custom_call.1} parent=1 // loop_pre_header
      _
    $region3: #{tpu_custom_call.1} parent=1 // loop_header
      %s15 = sphi 0, %s19
      %p16 = scmp.ge.s32.totalorder %s15, 10
      %s22 = sphi 0, %s41
      %s23 = sphi 0, %s37
      %s24 = sphi 0, %s33
      %s25 = sphi 0, %s22
      %s26 = sphi 0, %s23
      %s27 = sphi 0, %s24
      %s28 = sphi 0, %s25
      %s29 = sphi 0, %s26
      %s30 = sphi 0, %s27
      %s46 = sphi 0, %s48
      %s49 = sphi 0, %s46
      %s50 = sphi 0, %s49
      %s66 = sphi 0, %s50
      %s72 = sphi 0, %s74
      %s75 = sphi 0, %s72
      %s76 = sphi 0, %s75
      %s92 = sphi 0, %s76
      %s98 = sphi 0, %s100
      %s101 = sphi 0, %s98
      %s102 = sphi 0, %s101
      %s118 = sphi 0, %s102
      %s128 = sphi 0, %s130
      %s131 = sphi 0, %s128
      %s132 = sphi 0, %s131
      %s148 = sphi 0, %s132
    $region4: #{tpu_custom_call.1} parent=1 // loop_header_branch
      %18 = sbr.rel (%p16) target = $region8
    $region5: #{tpu_custom_call.1} parent=1 // loop_body
      %s20 = ssub.s32 %s15, 1
      %s21 = ssub.s32 %s15, 2
      %s31 = sadd.s32 1, %s24
      %p32 = scmp.ge.s32.totalorder %s31, 1
      %s33 = scalar_select %p32, 0, %s31
      %s34 = sadd.s32 1, %s23
      %s35 = scalar_select %p32, %s34, %s23
      %p36 = scmp.ge.s32.totalorder %s35, 4
      %s37 = scalar_select %p36, 0, %s35
      %s38 = sadd.s32 1, %s22
      %s39 = scalar_select %p36, %s38, %s22
      %p40 = scmp.ge.s32.totalorder %s39, 2
      %s41 = scalar_select %p40, 0, %s39
      %s42 = ssub.s32 %s22, %s41
      %s43 = ssub.s32 %s24, %s33
      %s44 = sor.u32 %s42, %s43
      %p45 = scmp.eq.s32.totalorder %s44, 0
      %s47 = sadd.s32 %s46, 1
      %s48 = scalar_select %p45, %s46, %s47
      %p51 = pneg %p45
      %p52 = scmp.eq.s32.totalorder %s15, 7
      %p53 = por %p51, %p52
      %p54 = scmp.ne.s32.totalorder %s46, %s49
      %p55 = scmp.eq.s32.totalorder %s15, 0
      %p56 = por %p54, %p55
      %p57 = scmp.ne.s32.totalorder %s46, %s49
      %p58 = scmp.eq.s32.totalorder %s20, 7
      %p59 = por %p57, %p58
      %p60 = scmp.ne.s32.totalorder %s49, %s50
      %p61 = scmp.eq.s32.totalorder %s20, 0
      %p62 = por %p60, %p61
      %p63 = scmp.ne.s32.totalorder %s49, %s50
      %p64 = scmp.eq.s32.totalorder %s21, 7
      %p65 = por %p63, %p64
      %p67 = scmp.ne.s32.totalorder %s50, %s66
      %p68 = scmp.eq.s32.totalorder %s21, 0
      %p69 = por %p67, %p68
      %s70 = ssub.s32 %s22, %s41
      %p71 = scmp.eq.s32.totalorder %s70, 0
      %s73 = sadd.s32 %s72, 1
      %s74 = scalar_select %p71, %s72, %s73
      %p77 = pneg %p71
      %p78 = scmp.eq.s32.totalorder %s15, 7
      %p79 = por %p77, %p78
      %p80 = scmp.ne.s32.totalorder %s72, %s75
      %p81 = scmp.eq.s32.totalorder %s15, 0
      %p82 = por %p80, %p81
      %p83 = scmp.ne.s32.totalorder %s72, %s75
      %p84 = scmp.eq.s32.totalorder %s20, 7
      %p85 = por %p83, %p84
      %p86 = scmp.ne.s32.totalorder %s75, %s76
      %p87 = scmp.eq.s32.totalorder %s20, 0
      %p88 = por %p86, %p87
      %p89 = scmp.ne.s32.totalorder %s75, %s76
      %p90 = scmp.eq.s32.totalorder %s21, 7
      %p91 = por %p89, %p90
      %p93 = scmp.ne.s32.totalorder %s76, %s92
      %p94 = scmp.eq.s32.totalorder %s21, 0
      %p95 = por %p93, %p94
      %s96 = ssub.s32 %s23, %s37
      %p97 = scmp.eq.s32.totalorder %s96, 0
      %s99 = sadd.s32 %s98, 1
      %s100 = scalar_select %p97, %s98, %s99
      %p103 = pneg %p97
      %p104 = scmp.eq.s32.totalorder %s15, 7
      %p105 = por %p103, %p104
      %p106 = scmp.ne.s32.totalorder %s98, %s101
      %p107 = scmp.eq.s32.totalorder %s15, 0
      %p108 = por %p106, %p107
      %p109 = scmp.ne.s32.totalorder %s98, %s101
      %p110 = scmp.eq.s32.totalorder %s20, 7
      %p111 = por %p109, %p110
      %p112 = scmp.ne.s32.totalorder %s101, %s102
      %p113 = scmp.eq.s32.totalorder %s20, 0
      %p114 = por %p112, %p113
      %p115 = scmp.ne.s32.totalorder %s101, %s102
      %p116 = scmp.eq.s32.totalorder %s21, 7
      %p117 = por %p115, %p116
      %p119 = scmp.ne.s32.totalorder %s102, %s118
      %p120 = scmp.eq.s32.totalorder %s21, 0
      %p121 = por %p119, %p120
      %s122 = ssub.s32 %s22, %s41
      %s123 = ssub.s32 %s23, %s37
      %s124 = sor.u32 %s122, %s123
      %s125 = ssub.s32 %s24, %s33
      %s126 = sor.u32 %s124, %s125
      %p127 = scmp.eq.s32.totalorder %s126, 0
      %s129 = sadd.s32 %s128, 1
      %s130 = scalar_select %p127, %s128, %s129
      %p133 = pneg %p127
      %p134 = scmp.eq.s32.totalorder %s15, 7
      %p135 = por %p133, %p134
      %p136 = scmp.ne.s32.totalorder %s128, %s131
      %p137 = scmp.eq.s32.totalorder %s15, 0
      %p138 = por %p136, %p137
      %p139 = scmp.ne.s32.totalorder %s128, %s131
      %p140 = scmp.eq.s32.totalorder %s20, 7
      %p141 = por %p139, %p140
      %p142 = scmp.ne.s32.totalorder %s131, %s132
      %p143 = scmp.eq.s32.totalorder %s20, 0
      %p144 = por %p142, %p143
      %p145 = scmp.ne.s32.totalorder %s131, %s132
      %p146 = scmp.eq.s32.totalorder %s21, 7
      %p147 = por %p145, %p146
      %p149 = scmp.ne.s32.totalorder %s132, %s148
      %p150 = scmp.eq.s32.totalorder %s21, 0
      %p151 = por %p149, %p150
      %p152 = scmp.le.s32.totalorder 1, %s15
      %p153 = scmp.lt.s32.totalorder %s15, 9
      %p154 = pnand %p152, %p153
      %p155 = pneg %p154
      // Predicated region
      $region9: #{tpu_custom_call.1} parent=5 // pred_check
        _
      $region10: #{tpu_custom_call.1} parent=5 // pred_check_branch
        %157 = sbr.rel (%p154) target = $region12
      $region11: #{tpu_custom_call.1} parent=5 // pred_region
        %s158 = ssub.s32 %s15, 1
      $region12: #{tpu_custom_call.1} parent=5 // pred_fallthru
        _
      %p159 = scmp.lt.s32.totalorder %s15, 8
      // Predicated region
      $region13: #{tpu_custom_call.1} parent=5 // pred_check
        %p160 = pneg %p159
      $region14: #{tpu_custom_call.1} parent=5 // pred_check_branch
        %162 = sbr.rel (%p160) target = $region16
      $region15: #{tpu_custom_call.1} parent=5 // pred_region
        // Predicated region
        $region17: #{tpu_custom_call.1} parent=15 // pred_check
          %p163 = pneg %p56
        $region18: #{tpu_custom_call.1} parent=15 // pred_check_branch
          %165 = sbr.rel (%p163) target = $region20
        $region19: #{tpu_custom_call.1} parent=15 // pred_region
          %p166 = scmp.lt.s32.totalorder %s22, 1
          %s167 = scalar_select %p166, %s22, 1
          %p168 = scmp.lt.s32.totalorder %s24, 0
          %s169 = scalar_select %p168, %s24, 0
          %s170 = sadd.s32 %s169, %s167
          %s171 = smul.addr %s170, 8
          %s172 = scalar_lea.vmem %s0, %s171
        $region20: #{tpu_custom_call.1} parent=15 // pred_fallthru
          _
        // Predicated region
        $region21: #{tpu_custom_call.1} parent=15 // pred_check
          %p173 = pneg %p82
        $region22: #{tpu_custom_call.1} parent=15 // pred_check_branch
          %175 = sbr.rel (%p173) target = $region24
        $region23: #{tpu_custom_call.1} parent=15 // pred_region
          %p176 = scmp.lt.s32.totalorder %s22, 1
          %s177 = scalar_select %p176, %s22, 1
          %s178 = smul.addr %s177, 16
          %s179 = smul.addr %s178, 8
          %s180 = scalar_lea.vmem %s1, %s179
        $region24: #{tpu_custom_call.1} parent=15 // pred_fallthru
          _
        // Predicated region
        $region25: #{tpu_custom_call.1} parent=15 // pred_check
          %p181 = pneg %p108
        $region26: #{tpu_custom_call.1} parent=15 // pred_check_branch
          %183 = sbr.rel (%p181) target = $region28
        $region27: #{tpu_custom_call.1} parent=15 // pred_region
          %s184 = sand.u32 %s98, 1
          %s185 = scalar_lea.sflag [#allocation3], %s184
          %s186 = sand.u32 %s98, 1
          %s187 = smul.addr %s186, 128
          %s188 = scalar_lea.vmem [#allocation2], %s187
          %190 = vsyncadd %s185, 0
          %s191 = smul.addr %s23, 16
          %s192 = smul.addr %s191, 8
          %s193 = scalar_lea.hbm %s2, %s192
          %s194 = sshll.u32 %s193, 4
          %s195 = int_to_ptr.hbm [resolvable:$true] %s194
          %s196 = sshll.u32 %s188, 4
          %s197 = int_to_ptr.vmem [resolvable:$true] %s196
          %202 = dma.hbm_to_vmem [thread:$0]  %s195, 2048, %s197, %s185, 128, 128, 8
        $region28: #{tpu_custom_call.1} parent=15 // pred_fallthru
          _
      $region16: #{tpu_custom_call.1} parent=5 // pred_fallthru
        _
      %p203 = scmp.le.s32.totalorder 1, %s15
      %p204 = scmp.lt.s32.totalorder %s15, 9
      %p205 = pnand %p203, %p204
      %p206 = pneg %p205
      // Predicated region
      $region29: #{tpu_custom_call.1} parent=5 // pred_check
        _
      $region30: #{tpu_custom_call.1} parent=5 // pred_check_branch
        %208 = sbr.rel (%p205) target = $region32
      $region31: #{tpu_custom_call.1} parent=5 // pred_region
        %s209 = ssub.s32 %s15, 1
        %s210 = sand.u32 %s101, 1
        %s211 = scalar_lea.sflag [#allocation3], %s210
        %s212 = sand.u32 %s101, 1
        %s213 = smul.addr %s212, 128
        %s214 = scalar_lea.vmem [#allocation2], %s213
        // Predicated region
        $region33: #{tpu_custom_call.1} parent=31 // pred_check
          %p215 = pneg %p114
        $region34: #{tpu_custom_call.1} parent=31 // pred_check_branch
          %217 = sbr.rel (%p215) target = $region36
        $region35: #{tpu_custom_call.1} parent=31 // pred_region
          %219 = dma.done %s211, 2048
        $region36: #{tpu_custom_call.1} parent=31 // pred_fallthru
          _
        %p220 = scmp.lt.s32.totalorder %s25, 1
        %s221 = scalar_select %p220, %s25, 1
        %p222 = scmp.lt.s32.totalorder %s27, 0
        %s223 = scalar_select %p222, %s27, 0
        %s224 = sadd.s32 %s223, %s221
        %s225 = smul.addr %s224, 8
        %s226 = scalar_lea.vmem %s0, %s225
        %p227 = pneg %p62
        %p228 = pneg %p59
        %p229 = scmp.lt.s32.totalorder %s25, 1
        %s230 = scalar_select %p229, %s25, 1
        %s231 = smul.addr %s230, 16
        %s232 = smul.addr %s231, 8
        %s233 = scalar_lea.vmem %s1, %s232
        %p234 = pneg %p88
        %p235 = pneg %p85
        %s236 = sand.u32 %s101, 1
        %s237 = scalar_lea.sflag [#allocation3], %s236
        %s238 = sand.u32 %s101, 1
        %s239 = smul.addr %s238, 128
        %s240 = scalar_lea.vmem [#allocation2], %s239
        %p241 = pneg %p114
        %p242 = pneg %p111
        %p243 = pneg %p144
        %p244 = pneg %p141
        %s245 = sand.u32 %s131, 1
        %s246 = scalar_lea.sflag [#allocation4], %s245
        %s247 = sand.u32 %s131, 1
        %s248 = smul.addr %s247, 8
        %s249 = scalar_lea.vmem [#allocation5], %s248
        %p250 = scmp.lt.s32.totalorder %s25, 1
        %s251 = scalar_select %p250, %s25, 1
        %p252 = scmp.lt.s32.totalorder %s27, 0
        %s253 = scalar_select %p252, %s27, 0
        %s254 = sadd.s32 %s253, %s251
        %s255 = smul.addr %s254, 8
        %s256 = scalar_lea.vmem %s0, %s255
        %p257 = scmp.lt.s32.totalorder %s25, 1
        %s258 = scalar_select %p257, %s25, 1
        %s259 = smul.addr %s258, 16
        %s260 = smul.addr %s259, 8
        %s261 = scalar_lea.vmem %s1, %s260
        %v262 = vld [vmem:[%s256] sm:$0xff]
        %v263 = vld [vmem:[%s214] sm:$0xff]
        %v264 = vld [vmem:[%s214 + $0x8] sm:$0xff]
        %v265 = vld [vmem:[%s214 + $0x10] sm:$0xff]
        %v266 = vld [vmem:[%s214 + $0x18] sm:$0xff]
        %v267 = vld [vmem:[%s214 + $0x20] sm:$0xff]
        %v268 = vld [vmem:[%s214 + $0x28] sm:$0xff]
        %v269 = vld [vmem:[%s214 + $0x30] sm:$0xff]
        %v270 = vld [vmem:[%s214 + $0x38] sm:$0xff]
        %v271 = vld [vmem:[%s214 + $0x40] sm:$0xff]
        %v272 = vld [vmem:[%s214 + $0x48] sm:$0xff]
        %v273 = vld [vmem:[%s214 + $0x50] sm:$0xff]
        %v274 = vld [vmem:[%s214 + $0x58] sm:$0xff]
        %v275 = vld [vmem:[%s214 + $0x60] sm:$0xff]
        %v276 = vld [vmem:[%s214 + $0x68] sm:$0xff]
        %v277 = vld [vmem:[%s214 + $0x70] sm:$0xff]
        %v278 = vld [vmem:[%s214 + $0x78] sm:$0xff]
        %279 = vmatpush.msra.mxu0 %v278
        %280 = vmatpush.msra.mxu0 %v277
        %281 = vmatpush.msra.mxu0 %v276
        %282 = vmatpush.msra.mxu0 %v275
        %283 = vmatpush.msra.mxu0 %v274
        %284 = vmatpush.msra.mxu0 %v273
        %285 = vmatpush.msra.mxu0 %v272
        %286 = vmatpush.msra.mxu0 %v271
        %287 = vmatpush.msra.mxu0 %v270
        %288 = vmatpush.msra.mxu0 %v269
        %289 = vmatpush.msra.mxu0 %v268
        %290 = vmatpush.msra.mxu0 %v267
        %291 = vmatpush.msra.mxu0 %v266
        %292 = vmatpush.msra.mxu0 %v265
        %293 = vmatpush.msra.mxu0 %v264
        %294 = vmatpush.msra.mxu0 %v263
        %295 = vmatmul.f32.gmra.mxu0 %v262
        %v296 = vpop.f32.mrf.mxu0
        %v297 = vadd.f32 0.0, %v296
        %298 = vdwg.mxu0
        %v299 = vld [vmem:[%s261] sm:$0xff]
        %v300 = vld [vmem:[%s261 + $0x8] sm:$0xff]
        %v301 = vld [vmem:[%s261 + $0x10] sm:$0xff]
        %v302 = vld [vmem:[%s261 + $0x18] sm:$0xff]
        %v303 = vld [vmem:[%s261 + $0x20] sm:$0xff]
        %v304 = vld [vmem:[%s261 + $0x28] sm:$0xff]
        %v305 = vld [vmem:[%s261 + $0x30] sm:$0xff]
        %v306 = vld [vmem:[%s261 + $0x38] sm:$0xff]
        %v307 = vld [vmem:[%s261 + $0x40] sm:$0xff]
        %v308 = vld [vmem:[%s261 + $0x48] sm:$0xff]
        %v309 = vld [vmem:[%s261 + $0x50] sm:$0xff]
        %v310 = vld [vmem:[%s261 + $0x58] sm:$0xff]
        %v311 = vld [vmem:[%s261 + $0x60] sm:$0xff]
        %v312 = vld [vmem:[%s261 + $0x68] sm:$0xff]
        %v313 = vld [vmem:[%s261 + $0x70] sm:$0xff]
        %v314 = vld [vmem:[%s261 + $0x78] sm:$0xff]
        %315 = vmatpush.msra.mxu0 %v314
        %316 = vmatpush.msra.mxu0 %v313
        %317 = vmatpush.msra.mxu0 %v312
        %318 = vmatpush.msra.mxu0 %v311
        %319 = vmatpush.msra.mxu0 %v310
        %320 = vmatpush.msra.mxu0 %v309
        %321 = vmatpush.msra.mxu0 %v308
        %322 = vmatpush.msra.mxu0 %v307
        %323 = vmatpush.msra.mxu0 %v306
        %324 = vmatpush.msra.mxu0 %v305
        %325 = vmatpush.msra.mxu0 %v304
        %326 = vmatpush.msra.mxu0 %v303
        %327 = vmatpush.msra.mxu0 %v302
        %328 = vmatpush.msra.mxu0 %v301
        %329 = vmatpush.msra.mxu0 %v300
        %330 = vmatpush.msra.mxu0 %v299
        %331 = vmatmul.f32.gmra.mxu0 %v297
        %v332 = vpop.f32.mrf.mxu0
        %v333 = vadd.f32 0.0, %v332
        %334 = vdwg.mxu0
        %vm335 = vcmask 64512
        %336 = vst.msk [vmem:[%s249] sm:$0xff] %vm335, %v333
        %s337 = sand.u32 %s131, 1
        %s338 = scalar_lea.sflag [#allocation4], %s337
        %s339 = sand.u32 %s131, 1
        %s340 = smul.addr %s339, 8
        %s341 = scalar_lea.vmem [#allocation5], %s340
        // Predicated region
        $region37: #{tpu_custom_call.1} parent=31 // pred_check
          %p342 = pneg %p141
        $region38: #{tpu_custom_call.1} parent=31 // pred_check_branch
          %344 = sbr.rel (%p342) target = $region40
        $region39: #{tpu_custom_call.1} parent=31 // pred_region
          %346 = vsyncadd %s338, 0
          %s347 = sadd.s32 %s27, %s26
          %s348 = smul.addr %s25, 4
          %s349 = sadd.s32 %s347, %s348
          %s350 = smul.addr %s349, 8
          %s351 = scalar_lea.hbm %s3, %s350
          %s353 = sshll.u32 %s341, 4
          %s354 = int_to_ptr.vmem [resolvable:$true] %s353
          %s355 = sshll.u32 %s351, 4
          %s356 = int_to_ptr.hbm [resolvable:$true] %s355
          %358 = dma.vmem_to_hbm [thread:$0]  %s354, 128, %s356, %s338
        $region40: #{tpu_custom_call.1} parent=31 // pred_fallthru
          _
      $region32: #{tpu_custom_call.1} parent=5 // pred_fallthru
        _
      %p359 = scmp.le.s32.totalorder 2, %s15
      // Predicated region
      $region41: #{tpu_custom_call.1} parent=5 // pred_check
        %p360 = pneg %p359
      $region42: #{tpu_custom_call.1} parent=5 // pred_check_branch
        %362 = sbr.rel (%p360) target = $region44
      $region43: #{tpu_custom_call.1} parent=5 // pred_region
        %s363 = ssub.s32 %s15, 2
        // Predicated region
        $region45: #{tpu_custom_call.1} parent=43 // pred_check
          %p364 = pneg %p147
        $region46: #{tpu_custom_call.1} parent=43 // pred_check_branch
          %366 = sbr.rel (%p364) target = $region48
        $region47: #{tpu_custom_call.1} parent=43 // pred_region
          %s367 = sand.u32 %s132, 1
          %s368 = scalar_lea.sflag [#allocation4], %s367
          %s369 = sand.u32 %s132, 1
          %s370 = smul.addr %s369, 8
          %s371 = scalar_lea.vmem [#allocation5], %s370
          %373 = dma.done %s368, 128
        $region48: #{tpu_custom_call.1} parent=43 // pred_fallthru
          _
      $region44: #{tpu_custom_call.1} parent=5 // pred_fallthru
        _
    $region6: #{tpu_custom_call.1} parent=1 // loop_footer
      %s19 = sadd.s32 1, %s15
    $region7: #{tpu_custom_call.1} parent=1 // loop_footer_branch
      %14 = sbr.rel target = $region3
    $region8: #{tpu_custom_call.1} parent=1 // loop_exit
      _
    %374 = vsyncpa [#allocation3], 1
    %s375 = scalar_lea.sflag [#allocation3], 1
    %376 = vsyncpa %s375, 1
    %377 = vsyncpa [#allocation4], 1
    %s378 = scalar_lea.sflag [#allocation4], 1
    %379 = vsyncpa %s378, 1

</llo_original>
